<compile_context>
chip_gen: v5e
topology: v5e:2x2
jax: 0.10.0
libtpu: 0.0.40
codegen_flags: <defaults>
</compile_context>

<pallas_src>
import functools
import math

import jax
import jax.numpy as jnp
from jax.experimental import pallas as pl
from jax.experimental.pallas import tpu as pltpu


# --------------------------------------------------------------------------- #
# Kernels
# --------------------------------------------------------------------------- #

def _ffn_fused_kernel(x_ref, w1_ref, b1_ref, w2_ref, b2_ref, o_ref):
    """Standard layout, weights fully VMEM-resident (n_f == 1)."""
    x = x_ref[...].astype(w1_ref.dtype)                 # in-kernel cast (VPU)
    h = jnp.dot(x, w1_ref[...], preferred_element_type=jnp.float32)
    h = jnp.maximum(h + b1_ref[...], 0.0)               # bias + ReLU in f32
    # Dropout -> identity (eval mode).
    y = jnp.dot(h.astype(w2_ref.dtype), w2_ref[...],
                preferred_element_type=jnp.float32)
    o_ref[...] = (y + b2_ref[...]).astype(o_ref.dtype)


def _ffn_acc_kernel(x_ref, w1_ref, b1_ref, w2_ref, b2_ref, o_ref, acc_ref):
    """Standard layout with the ff (F) axis tiled; f32 accumulator resident
    across the f grid axis.  Only used when the weights don't fit VMEM."""
    f = pl.program_id(1)
    x = x_ref[...].astype(w1_ref.dtype)
    h = jnp.dot(x, w1_ref[...], preferred_element_type=jnp.float32)
    h = jnp.maximum(h + b1_ref[...], 0.0)
    partial = jnp.dot(h.astype(w2_ref.dtype), w2_ref[...],
                      preferred_element_type=jnp.float32)

    @pl.when(f == 0)
    def _():                               # seed with b2: no zero-init, no finalize add
        acc_ref[...] = partial + b2_ref[...]

    @pl.when(f > 0)
    def _():
        acc_ref[...] += partial

    @pl.when(f == pl.num_programs(1) - 1)
    def _():
        o_ref[...] = acc_ref[...].astype(o_ref.dtype)


def _ffn_fused_t_kernel(xt_ref, w1t_ref, b1t_ref, w2t_ref, b2t_ref, ot_ref):
    """Transposed layout for small H/F: M on lanes, H/F on sublanes."""
    xt = xt_ref[...].astype(w1t_ref.dtype)                               # (H, tml)
    h = jnp.dot(w1t_ref[...], xt, preferred_element_type=jnp.float32)   # (F, tml)
    h = jnp.maximum(h + b1t_ref[...], 0.0)
    # Dropout -> identity (eval mode).
    y = jnp.dot(w2t_ref[...], h.astype(w2t_ref.dtype),
                preferred_element_type=jnp.float32)                     # (H, tml)
    ot_ref[...] = (y + b2t_ref[...]).astype(ot_ref.dtype)


# --------------------------------------------------------------------------- #
# Helpers
# --------------------------------------------------------------------------- #

def _round_up(v, m):
    return ((v + m - 1) // m) * m


def _vmem_budget_bytes():
    """Per-chip VMEM budget with headroom (64 MiB fallback is safe everywhere)."""
    cap = 64 * 2**20
    try:
        info = pltpu.get_tpu_info()
        cap = int(getattr(info, "vmem_capacity_bytes", cap)) or cap
    except Exception:
        pass
    return int(0.75 * cap)


# --------------------------------------------------------------------------- #
# Jitted apply functions
# --------------------------------------------------------------------------- #

@functools.partial(jax.jit, static_argnames=("H", "F", "compute_dtype",
                                             "out_dtype", "vmem_budget"))
def _ffn_apply_transposed(x, w1t, b1t, w2t, b2t, *, H, F, compute_dtype,
                          out_dtype, vmem_budget):
    lead = x.shape[:-1]
    M = math.prod(lead) if lead else 1
    x2 = x.reshape(M, H)

    # Lane tile over rows; pad M (lane axis) to the tile.
    tml = 512
    while tml > 128 and tml > _round_up(M, 128):
        tml //= 2
    Mp = _round_up(M, tml)
    n_m = Mp // tml

    # Transpose + pad + cast in one wrapper pass (bf16 halves the temp traffic).
    xt = jnp.pad(x2.T.astype(compute_dtype), ((0, 0), (0, Mp - M)))      # (H, Mp)

    cb = jnp.dtype(compute_dtype).itemsize
    ob = jnp.dtype(out_dtype).itemsize
    est = (2 * H * tml * cb + 2 * H * tml * ob      # double-buffered x^T / y^T tiles
           + F * tml * 4 + H * tml * 4              # ReLU intermediate + result
           + 2 * F * H * cb + (F + H) * 4)          # resident weights + biases
    vmem_limit = int(max(vmem_budget, est + (2 << 20)))

    out_t = pl.pallas_call(
        _ffn_fused_t_kernel,
        out_shape=jax.ShapeDtypeStruct((H, Mp), out_dtype),
        grid_spec=pltpu.PrefetchScalarGridSpec(
            num_scalar_prefetch=0,
            grid=(n_m,),
            in_specs=[
                pl.BlockSpec((H, tml), lambda i: (0, i)),   # x^T row-lane tile
                pl.BlockSpec((F, H), lambda i: (0, 0)),     # W1^T (resident)
                pl.BlockSpec((F, 1), lambda i: (0, 0)),     # b1
                pl.BlockSpec((H, F), lambda i: (0, 0)),     # W2^T (resident)
                pl.BlockSpec((H, 1), lambda i: (0, 0)),     # b2
            ],
            out_specs=pl.BlockSpec((H, tml), lambda i: (0, i)),
        ),
        compiler_params=pltpu.CompilerParams(
            dimension_semantics=("parallel",),
            vmem_limit_bytes=vmem_limit,
        ),
    )(xt, w1t, b1t, w2t, b2t)

    return out_t[:, :M].T.reshape(*lead, H)


@functools.partial(jax.jit, static_argnames=("H", "F", "Hp", "Fp",
                                             "compute_dtype", "out_dtype",
                                             "vmem_budget"))
def _ffn_apply_standard(x, w1p, b1p, w2p, b2p, *, H, F, Hp, Fp, compute_dtype,
                        out_dtype, vmem_budget):
    lead = x.shape[:-1]
    M = math.prod(lead) if lead else 1
    x2 = x.reshape(M, H)

    cb = jnp.dtype(compute_dtype).itemsize
    ob = jnp.dtype(out_dtype).itemsize
    sub = 16 if cb == 2 else 8

    # Only pad x when H is not lane-aligned; otherwise cast happens in-kernel.
    if Hp == H:
        x_in = x2
    else:
        x_in = jnp.pad(x2, ((0, 0), (0, Hp - H))).astype(compute_dtype)
    xb = jnp.dtype(x_in.dtype).itemsize

    w_resident = 2 * Hp * Fp * cb + (Fp + Hp) * 4

    def est(tm, tf, n_f):
        e = 2 * tm * Hp * xb + 2 * tm * Hp * ob        # double-buffered x / out tiles
        e += tm * tf * 4 + tm * Hp * 4                 # ReLU intermediate + result/acc
        if n_f == 1:
            e += w_resident                            # weights DMA'd once, single copy
        else:
            e += 2 * ((Hp * tf + tf * Hp) * cb + (tf + Hp) * 4)
        return e

    # Row tile: as big as the budget allows (cap 1024); no forced >=2-way split.
    tm = min(1024, _round_up(M, sub))

    # Prefer weights fully VMEM-resident (n_f == 1): no per-row-tile re-streaming.
    tm_res = tm
    while tm_res > sub and est(tm_res, Fp, 1) > vmem_budget:
        tm_res = max(sub, _round_up(tm_res // 2, sub))

    if est(tm_res, Fp, 1) <= vmem_budget and tm_res >= min(tm, 256):
        tm, tf, n_f = tm_res, Fp, 1
    else:
        # Tile the ff axis; prefer 512/256 (2x256 MXU on v6e/v7x), 128 fallback.
        tf = next((c for c in (512, 256, 128) if Fp % c == 0), 128)
        n_f = Fp // tf
        while tm > sub and est(tm, tf, n_f) > vmem_budget:
            tm = max(sub, _round_up(tm // 2, sub))

    n_m = pl.cdiv(M, tm)
    vmem_limit = int(max(vmem_budget, est(tm, tf, n_f) + (2 << 20)))

    if n_f == 1:
        out_p = pl.pallas_call(
            _ffn_fused_kernel,
            out_shape=jax.ShapeDtypeStruct((M, Hp), out_dtype),
            grid_spec=pltpu.PrefetchScalarGridSpec(
                num_scalar_prefetch=0,
                grid=(n_m,),
                in_specs=[
                    pl.BlockSpec((tm, Hp), lambda i: (i, 0)),   # x row tile
                    pl.BlockSpec((Hp, Fp), lambda i: (0, 0)),   # W1 (resident)
                    pl.BlockSpec((1, Fp), lambda i: (0, 0)),    # b1
                    pl.BlockSpec((Fp, Hp), lambda i: (0, 0)),   # W2 (resident)
                    pl.BlockSpec((1, Hp), lambda i: (0, 0)),    # b2
                ],
                out_specs=pl.BlockSpec((tm, Hp), lambda i: (i, 0)),
            ),
            compiler_params=pltpu.CompilerParams(
                dimension_semantics=("parallel",),
                vmem_limit_bytes=vmem_limit,
            ),
        )(x_in, w1p, b1p, w2p, b2p)
    else:
        out_p = pl.pallas_call(
            _ffn_acc_kernel,
            out_shape=jax.ShapeDtypeStruct((M, Hp), out_dtype),
            grid_spec=pltpu.PrefetchScalarGridSpec(
                num_scalar_prefetch=0,
                grid=(n_m, n_f),
                in_specs=[
                    pl.BlockSpec((tm, Hp), lambda i, f: (i, 0)),
                    pl.BlockSpec((Hp, tf), lambda i, f: (0, f)),
                    pl.BlockSpec((1, tf), lambda i, f: (0, f)),
                    pl.BlockSpec((tf, Hp), lambda i, f: (f, 0)),
                    pl.BlockSpec((1, Hp), lambda i, f: (0, 0)),
                ],
                out_specs=pl.BlockSpec((tm, Hp), lambda i, f: (i, 0)),
                scratch_shapes=[pltpu.VMEM((tm, Hp), jnp.float32)],
            ),
            compiler_params=pltpu.CompilerParams(
                dimension_semantics=("parallel", "arbitrary"),
                vmem_limit_bytes=vmem_limit,
            ),
        )(x_in, w1p, b1p, w2p, b2p)

    out2 = out_p[:, :H] if Hp != H else out_p
    return out2.reshape(*lead, H)


# --------------------------------------------------------------------------- #
# Public API: prepare the FFN params once, return an apply(x) callable.
# --------------------------------------------------------------------------- #

def make_ffn(w1, b1, w2, b2, *, compute_dtype=jnp.bfloat16, out_dtype=None):
    """Prepare (pad / cast / transpose) FFN parameters once and return a jitted
    callable x -> ReLU(x @ w1 + b1) @ w2 + b2.
    w1: [H, F], b1: [F], w2: [F, H], b2: [H]."""
    H, F = w1.shape
    assert w2.shape == (F, H) and b1.shape == (F,) and b2.shape == (H,)
    cd = jnp.dtype(compute_dtype)
    budget = _vmem_budget_bytes()

    # Small feature dims -> transposed layout (no 128-lane padding of H/F).
    transposed = (H % 128 != 0 or F % 128 != 0) and H <= 256 and F <= 512
    if transposed:
        w1t = jnp.asarray(w1).T.astype(cd)                       # (F, H)
        w2t = jnp.asarray(w2).T.astype(cd)                       # (H, F)
        b1t = jnp.asarray(b1).reshape(F, 1).astype(jnp.float32)
        b2t = jnp.asarray(b2).reshape(H, 1).astype(jnp.float32)

        def apply(x):
            od = jnp.dtype(out_dtype) if out_dtype is not None else jnp.dtype(x.dtype)
            return _ffn_apply_transposed(x, w1t, b1t, w2t, b2t, H=H, F=F,
                                         compute_dtype=cd, out_dtype=od,
                                         vmem_budget=budget)
        return apply

    Hp = _round_up(H, 128)
    Fp = _round_up(F, 128)
    w1p = jnp.pad(jnp.asarray(w1), ((0, Hp - H), (0, Fp - F))).astype(cd)
    w2p = jnp.pad(jnp.asarray(w2), ((0, Fp - F), (0, Hp - H))).astype(cd)
    b1p = jnp.pad(jnp.asarray(b1).reshape(1, F), ((0, 0), (0, Fp - F))).astype(jnp.float32)
    b2p = jnp.pad(jnp.asarray(b2).reshape(1, H), ((0, 0), (0, Hp - H))).astype(jnp.float32)

    def apply(x):
        od = jnp.dtype(out_dtype) if out_dtype is not None else jnp.dtype(x.dtype)
        return _ffn_apply_standard(x, w1p, b1p, w2p, b2p, H=H, F=F, Hp=Hp, Fp=Fp,
                                   compute_dtype=cd, out_dtype=od,
                                   vmem_budget=budget)
    return apply


# --------------------------------------------------------------------------- #
# Demo / self-test
# --------------------------------------------------------------------------- #

if __name__ == "__main__":
    def check(out, x, w1, b1, w2, b2):
        q = lambda a: a.astype(jnp.bfloat16).astype(jnp.float32)
        x2 = x.reshape(-1, x.shape[-1])
        h = jnp.maximum(jnp.dot(q(x2), q(w1),
                                precision=jax.lax.Precision.HIGHEST) + b1, 0.0)
        ref_bf16 = (jnp.dot(q(h), q(w2), precision=jax.lax.Precision.HIGHEST)
                    + b2).reshape(out.shape)
        ref_f32 = (jnp.maximum(x2 @ w1 + b1, 0.0) @ w2 + b2).reshape(out.shape)
        assert jnp.allclose(out, ref_bf16, atol=2e-3, rtol=2e-3), "mismatch vs bf16 ref"
        assert jnp.allclose(out, ref_f32, atol=5e-2, rtol=5e-2), "mismatch vs f32 ref"

    # Module args: hidden_size=32, ff_size=64, dropout_r=0.1 (identity at eval).
    batch, seq, hidden, ff = 4, 16, 32, 64
    key = jax.random.PRNGKey(0)
    kx, k1, k2, k3, k4 = jax.random.split(key, 5)
    x = jax.random.normal(kx, (batch, seq, hidden), dtype=jnp.float32)
    lim1, lim2 = 1.0 / hidden ** 0.5, 1.0 / ff ** 0.5
    w1 = jax.random.uniform(k1, (hidden, ff), jnp.float32, -lim1, lim1)
    b1 = jax.random.uniform(k2, (ff,), jnp.float32, -lim1, lim1)
    w2 = jax.random.uniform(k3, (ff, hidden), jnp.float32, -lim2, lim2)
    b2 = jax.random.uniform(k4, (hidden,), jnp.float32, -lim2, lim2)

    ffn = make_ffn(w1, b1, w2, b2)              # pads/casts/transposes params once
    out = jax.block_until_ready(ffn(x))
    assert out.shape == (batch, seq, hidden) and out.dtype == x.dtype
    check(out, x, w1, b1, w2, b2)

    # Also exercise the standard (lane-aligned, weights-resident) path.
    hidden2, ff2 = 128, 256
    kx2, k5, k6, k7, k8 = jax.random.split(jax.random.PRNGKey(1), 5)
    x2 = jax.random.normal(kx2, (2, 8, hidden2), dtype=jnp.float32)
    l1, l2 = 1.0 / hidden2 ** 0.5, 1.0 / ff2 ** 0.5
    w1b = jax.random.uniform(k5, (hidden2, ff2), jnp.float32, -l1, l1)
    b1b = jax.random.uniform(k6, (ff2,), jnp.float32, -l1, l1)
    w2b = jax.random.uniform(k7, (ff2, hidden2), jnp.float32, -l2, l2)
    b2b = jax.random.uniform(k8, (hidden2,), jnp.float32, -l2, l2)
    out2 = jax.block_until_ready(make_ffn(w1b, b1b, w2b, b2b)(x2))
    check(out2, x2, w1b, b1b, w2b, b2b)

    print("KERNEL_OK")
</pallas_src>

<mosaic_0001>
module attributes {stable_mosaic.version = 11 : i64} {
  func.func @_ffn_fused_t_kernel(%arg0: i32, %arg1: memref<32x128xbf16, #tpu.memory_space<vmem>>, %arg2: memref<64x32xbf16, #tpu.memory_space<vmem>>, %arg3: memref<64x1xf32, #tpu.memory_space<vmem>>, %arg4: memref<32x64xbf16, #tpu.memory_space<vmem>>, %arg5: memref<32x1xf32, #tpu.memory_space<vmem>>, %arg6: memref<32x128xf32, #tpu.memory_space<vmem>>) attributes {dimension_semantics = [#tpu.dimension_semantics<parallel>], iteration_bounds = array<i64: 1>, scalar_prefetch = 0 : i64, scratch_operands = 0 : i64, tpu.core_type = #tpu.core_type<tc>, window_params = [{transform_indices = @transform_0, window_bounds = array<i64: 32, 128>}, {pipeline_mode = #tpu.pipeline_mode<synchronous>, transform_indices = @transform_1, window_bounds = array<i64: 64, 32>}, {pipeline_mode = #tpu.pipeline_mode<synchronous>, transform_indices = @transform_2, window_bounds = array<i64: 64, 1>}, {pipeline_mode = #tpu.pipeline_mode<synchronous>, transform_indices = @transform_3, window_bounds = array<i64: 32, 64>}, {pipeline_mode = #tpu.pipeline_mode<synchronous>, transform_indices = @transform_4, window_bounds = array<i64: 32, 1>}, {transform_indices = @transform_5, window_bounds = array<i64: 32, 128>}]} {
    %c0 = arith.constant 0 : index
    %c0_0 = arith.constant 0 : index
    %0 = vector.load %arg1[%c0, %c0_0] : memref<32x128xbf16, #tpu.memory_space<vmem>>, vector<32x128xbf16>
    %c0_1 = arith.constant 0 : index
    %c0_2 = arith.constant 0 : index
    %1 = vector.load %arg2[%c0_1, %c0_2] : memref<64x32xbf16, #tpu.memory_space<vmem>>, vector<64x32xbf16>
    %cst = arith.constant dense<0.000000e+00> : vector<64x128xf32>
    %2 = tpu.matmul %1, %0, %cst {dimension_numbers = #tpu.dot_dimension_numbers<[1], [0], [0], [1], [0, 0, 1, 1], [], []>} : vector<64x32xbf16>, vector<32x128xbf16>, vector<64x128xf32> -> vector<64x128xf32>
    %c0_3 = arith.constant 0 : index
    %c0_4 = arith.constant 0 : index
    %3 = vector.load %arg3[%c0_3, %c0_4] : memref<64x1xf32, #tpu.memory_space<vmem>>, vector<64x1xf32>
    %4 = vector.broadcast %3 : vector<64x1xf32> to vector<64x128xf32>
    %5 = arith.addf %2, %4 : vector<64x128xf32>
    %cst_5 = arith.constant 0.000000e+00 : f32
    %6 = vector.broadcast %cst_5 : f32 to vector<64x128xf32>
    %7 = arith.maximumf %5, %6 : vector<64x128xf32>
    %c0_6 = arith.constant 0 : index
    %c0_7 = arith.constant 0 : index
    %8 = vector.load %arg4[%c0_6, %c0_7] : memref<32x64xbf16, #tpu.memory_space<vmem>>, vector<32x64xbf16>
    %9 = arith.truncf %7 : vector<64x128xf32> to vector<64x128xbf16>
    %cst_8 = arith.constant dense<0.000000e+00> : vector<32x128xf32>
    %10 = tpu.matmul %8, %9, %cst_8 {dimension_numbers = #tpu.dot_dimension_numbers<[1], [0], [0], [1], [0, 0, 1, 1], [], []>} : vector<32x64xbf16>, vector<64x128xbf16>, vector<32x128xf32> -> vector<32x128xf32>
    %c0_9 = arith.constant 0 : index
    %c0_10 = arith.constant 0 : index
    %11 = vector.load %arg5[%c0_9, %c0_10] : memref<32x1xf32, #tpu.memory_space<vmem>>, vector<32x1xf32>
    %12 = vector.broadcast %11 : vector<32x1xf32> to vector<32x128xf32>
    %13 = arith.addf %10, %12 : vector<32x128xf32>
    %c0_11 = arith.constant 0 : index
    %c0_12 = arith.constant 0 : index
    %14 = vector.load %arg6[%c0_11, %c0_12] : memref<32x128xf32, #tpu.memory_space<vmem>>, vector<32x128xf32>
    tpu.vector_store %arg6[%c0_11, %c0_12], %13 {strides = array<i32>} : memref<32x128xf32, #tpu.memory_space<vmem>>, vector<32x128xf32>,
    return
  }
  func.func @transform_0(%arg0: i32) -> (i32, i32) {
    %c0_i32 = arith.constant 0 : i32
    %c0_i32_0 = arith.constant 0 : i32
    return %c0_i32, %arg0 : i32, i32
  }
  func.func @transform_1(%arg0: i32) -> (i32, i32) {
    %c0_i32 = arith.constant 0 : i32
    %c0_i32_0 = arith.constant 0 : i32
    %c0_i32_1 = arith.constant 0 : i32
    return %c0_i32, %c0_i32_0 : i32, i32
  }
  func.func @transform_2(%arg0: i32) -> (i32, i32) {
    %c0_i32 = arith.constant 0 : i32
    %c0_i32_0 = arith.constant 0 : i32
    %c0_i32_1 = arith.constant 0 : i32
    return %c0_i32, %c0_i32_0 : i32, i32
  }
  func.func @transform_3(%arg0: i32) -> (i32, i32) {
    %c0_i32 = arith.constant 0 : i32
    %c0_i32_0 = arith.constant 0 : i32
    %c0_i32_1 = arith.constant 0 : i32
    return %c0_i32, %c0_i32_0 : i32, i32
  }
  func.func @transform_4(%arg0: i32) -> (i32, i32) {
    %c0_i32 = arith.constant 0 : i32
    %c0_i32_0 = arith.constant 0 : i32
    %c0_i32_1 = arith.constant 0 : i32
    return %c0_i32, %c0_i32_0 : i32, i32
  }
  func.func @transform_5(%arg0: i32) -> (i32, i32) {
    %c0_i32 = arith.constant 0 : i32
    %c0_i32_0 = arith.constant 0 : i32
    return %c0_i32, %arg0 : i32, i32
  }
}

</mosaic_0001>

<llo_original>
// kernel: _ffn_apply_transposed.1
$region0: #{_ffn_apply_transposed.1}
  #allocation0 [shape = 'u32[]', space=smem, size = 0x4, offset = 0x4, fixed_abs, tag = 'smem constant byte address 0x4 - core index']
  #allocation1 [shape = 'u32[72,128]{1,0:T(1,128)}', space=vmem, size = 0x9000, scoped, tag = 'internal scratch']
  %s0 = inlined_call_operand.vmem [shape: bf16[32,128], index: 0, kind: input, shape index: {}]
  %s1 = inlined_call_operand.vmem [shape: bf16[64,32], index: 1, kind: input, shape index: {}]
  %s2 = inlined_call_operand.vmem [shape: f32[64,1], index: 2, kind: input, shape index: {}]
  %s3 = inlined_call_operand.vmem [shape: bf16[32,64], index: 3, kind: input, shape index: {}]
  %s4 = inlined_call_operand.vmem [shape: f32[32,1], index: 4, kind: input, shape index: {}]
  %s5 = inlined_call_operand.vmem [shape: f32[32,128], index: 5, kind: output, shape index: {}]
  %s6 = sld [smem:[#allocation0]]
  $region30: #{_ffn_apply_transposed.1} parent=0
    _
  %s8 = ssub.s32 1, %s6
  %s9 = scalar_select 0, %s8, %s6
  // Predicated region
  $region2: #{_ffn_apply_transposed.1} parent=0 // pred_check
    _
  $region3: #{_ffn_apply_transposed.1} parent=0 // pred_check_branch
    %11 = sbr.rel (0) target = $region5
  $region4: #{_ffn_apply_transposed.1} parent=0 // pred_region
    _
  $region5: #{_ffn_apply_transposed.1} parent=0 // pred_fallthru
    _
  // Predicated region
  $region6: #{_ffn_apply_transposed.1} parent=0 // pred_check
    _
  $region7: #{_ffn_apply_transposed.1} parent=0 // pred_check_branch
    %13 = sbr.rel (0) target = $region9
  $region8: #{_ffn_apply_transposed.1} parent=0 // pred_region
    _
  $region9: #{_ffn_apply_transposed.1} parent=0 // pred_fallthru
    _
  // Predicated region
  $region10: #{_ffn_apply_transposed.1} parent=0 // pred_check
    _
  $region11: #{_ffn_apply_transposed.1} parent=0 // pred_check_branch
    %15 = sbr.rel (0) target = $region13
  $region12: #{_ffn_apply_transposed.1} parent=0 // pred_region
    _
  $region13: #{_ffn_apply_transposed.1} parent=0 // pred_fallthru
    _
  // Predicated region
  $region14: #{_ffn_apply_transposed.1} parent=0 // pred_check
    _
  $region15: #{_ffn_apply_transposed.1} parent=0 // pred_check_branch
    %17 = sbr.rel (0) target = $region17
  $region16: #{_ffn_apply_transposed.1} parent=0 // pred_region
    _
  $region17: #{_ffn_apply_transposed.1} parent=0 // pred_fallthru
    _
  // Predicated region
  $region18: #{_ffn_apply_transposed.1} parent=0 // pred_check
    _
  $region19: #{_ffn_apply_transposed.1} parent=0 // pred_check_branch
    %19 = sbr.rel (0) target = $region21
  $region20: #{_ffn_apply_transposed.1} parent=0 // pred_region
    _
  $region21: #{_ffn_apply_transposed.1} parent=0 // pred_fallthru
    _
  %v21 = vld [vmem:[%s0] sm:$0xf]
  %v22 = vld [vmem:[%s0 + $0x4] sm:$0xf]
  %v23 = vld [vmem:[%s0 + $0x8] sm:$0xf]
  %v24 = vld [vmem:[%s0 + $0xc] sm:$0xf]
  %v25 = vld [vmem:[%s1] sm:$0xf]
  %v26 = vld [vmem:[%s1 + $0x4] sm:$0xf]
  %v27 = vld [vmem:[%s1 + $0x8] sm:$0xf]
  %v28 = vld [vmem:[%s1 + $0xc] sm:$0xf]
  %v29 = vld [vmem:[%s1 + $0x10] sm:$0xf]
  %v30 = vld [vmem:[%s1 + $0x14] sm:$0xf]
  %v31 = vld [vmem:[%s1 + $0x18] sm:$0xf]
  %v32 = vld [vmem:[%s1 + $0x1c] sm:$0xf]
  %v33 = vld [vmem:[%s2] sm:$0xff]
  %v34 = vld [vmem:[%s2 + $0x8] sm:$0xff]
  %v35 = vld [vmem:[%s2 + $0x10] sm:$0xff]
  %v36 = vld [vmem:[%s2 + $0x18] sm:$0xff]
  %v37 = vld [vmem:[%s2 + $0x20] sm:$0xff]
  %v38 = vld [vmem:[%s2 + $0x28] sm:$0xff]
  %v39 = vld [vmem:[%s2 + $0x30] sm:$0xff]
  %v40 = vld [vmem:[%s2 + $0x38] sm:$0xff]
  %42 = vset.pattern.permute.xlu0 0
  %43 = vperm.xlu0 %42, %v33
  %v44 = vpop.permute.xlu0 %43
  %47 = vset.pattern.permute.xlu0 0
  %48 = vperm.xlu0 %47, %v34
  %v49 = vpop.permute.xlu0 %48
  %52 = vset.pattern.permute.xlu0 0
  %53 = vperm.xlu0 %52, %v35
  %v54 = vpop.permute.xlu0 %53
  %57 = vset.pattern.permute.xlu0 0
  %58 = vperm.xlu0 %57, %v36
  %v59 = vpop.permute.xlu0 %58
  %62 = vset.pattern.permute.xlu0 0
  %63 = vperm.xlu0 %62, %v37
  %v64 = vpop.permute.xlu0 %63
  %67 = vset.pattern.permute.xlu0 0
  %68 = vperm.xlu0 %67, %v38
  %v69 = vpop.permute.xlu0 %68
  %72 = vset.pattern.permute.xlu0 0
  %73 = vperm.xlu0 %72, %v39
  %v74 = vpop.permute.xlu0 %73
  %77 = vset.pattern.permute.xlu0 0
  %78 = vperm.xlu0 %77, %v40
  %v79 = vpop.permute.xlu0 %78
  %v89 = vunpack.c.l.b16 %v25
  %v90 = vunpack.c.l.b16 %v26
  %v91 = vunpack.c.l.b16 %v27
  %v92 = vunpack.c.l.b16 %v28
  %v93 = vunpack.c.l.b16 %v29
  %v94 = vunpack.c.l.b16 %v30
  %v95 = vunpack.c.l.b16 %v31
  %v96 = vunpack.c.l.b16 %v32
  %v97 = vpack.c.b16 %v90, %v89
  %v98 = vpack.c.b16 %v92, %v91
  %v99 = vpack.c.b16 %v94, %v93
  %v100 = vpack.c.b16 %v96, %v95
  %v105 = vunpack.c.l.b16 %v21
  %v106 = vunpack.c.l.b16 %v22
  %v107 = vunpack.c.l.b16 %v23
  %v108 = vunpack.c.l.b16 %v24
  %v109 = vpack.c.b16 %v106, %v105
  %v110 = vpack.c.b16 %v108, %v107
  %vm113 = vcmask 261120
  %v115 = vsel %vm113, %v97, 0
  %v118 = vsel %vm113, %v98, 0
  %v121 = vsel %vm113, %v99, 0
  %v124 = vsel %vm113, %v100, 0
  %126 = vmatpush.bf16.msra.mxu0 0
  %127 = vmatpush.bf16.msra.mxu0 0
  %128 = vmatpush.bf16.msra.mxu0 0
  %129 = vmatpush.bf16.msra.mxu0 0
  %130 = vmatpush.bf16.msra.mxu0 0
  %131 = vmatpush.bf16.msra.mxu0 0
  %132 = vmatpush.bf16.msra.mxu0 %v110
  %133 = vmatpush.bf16.msra.mxu0 %v109
  %134 = vmatmul.bf16.gmra.mxu0 %v115
  %v135 = vpop.f32.mrf.mxu0
  %v136 = vadd.f32 %v44, %v135
  %v137 = vpop.f32.mrf.mxu0
  %v138 = vadd.f32 %v49, %v137
  %139 = vmatmul.bf16.gmra.mxu0 %v118
  %v140 = vpop.f32.mrf.mxu0
  %v141 = vadd.f32 %v54, %v140
  %v142 = vpop.f32.mrf.mxu0
  %v143 = vadd.f32 %v59, %v142
  %144 = vmatmul.bf16.gmra.mxu0 %v121
  %v145 = vpop.f32.mrf.mxu0
  %v146 = vadd.f32 %v64, %v145
  %v147 = vpop.f32.mrf.mxu0
  %v148 = vadd.f32 %v69, %v147
  %149 = vmatmul.bf16.gmra.mxu0 %v124
  %v150 = vpop.f32.mrf.mxu0
  %v151 = vadd.f32 %v74, %v150
  %v152 = vpop.f32.mrf.mxu0
  %v153 = vadd.f32 %v79, %v152
  %154 = vdwg.mxu0
  %v155 = vmax.f32 %v136, 0.0
  %v156 = vmax.f32 %v138, 0.0
  %v157 = vmax.f32 %v141, 0.0
  %v158 = vmax.f32 %v143, 0.0
  %v159 = vmax.f32 %v146, 0.0
  %v160 = vmax.f32 %v148, 0.0
  %v161 = vmax.f32 %v151, 0.0
  %v162 = vmax.f32 %v153, 0.0
  %v163 = vld [vmem:[%s3] sm:$0xf]
  %v164 = vld [vmem:[%s3 + $0x4] sm:$0xf]
  %v165 = vld [vmem:[%s3 + $0x8] sm:$0xf]
  %v166 = vld [vmem:[%s3 + $0xc] sm:$0xf]
  %v167 = vpack.c.bf16 %v156, %v155
  %v168 = vpack.c.bf16 %v158, %v157
  %v169 = vpack.c.bf16 %v160, %v159
  %v170 = vpack.c.bf16 %v162, %v161
  %v171 = vld [vmem:[%s4] sm:$0xff]
  %v172 = vld [vmem:[%s4 + $0x8] sm:$0xff]
  %v173 = vld [vmem:[%s4 + $0x10] sm:$0xff]
  %v174 = vld [vmem:[%s4 + $0x18] sm:$0xff]
  %176 = vset.pattern.permute.xlu0 0
  %177 = vperm.xlu0 %176, %v171
  %v178 = vpop.permute.xlu0 %177
  %181 = vset.pattern.permute.xlu0 0
  %182 = vperm.xlu0 %181, %v172
  %v183 = vpop.permute.xlu0 %182
  %186 = vset.pattern.permute.xlu0 0
  %187 = vperm.xlu0 %186, %v173
  %v188 = vpop.permute.xlu0 %187
  %191 = vset.pattern.permute.xlu0 0
  %192 = vperm.xlu0 %191, %v174
  %v193 = vpop.permute.xlu0 %192
  %v199 = vunpack.c.l.b16 %v163
  %v200 = vunpack.c.l.b16 %v164
  %v201 = vunpack.c.l.b16 %v165
  %v202 = vunpack.c.l.b16 %v166
  %v203 = vpack.c.b16 %v200, %v199
  %v204 = vpack.c.b16 %v202, %v201
  %vm205 = vcmask 523264
  %v207 = vsel %vm205, %v203, 0
  %v210 = vsel %vm205, %v204, 0
  %212 = vmatpush.bf16.msra.mxu0 0
  %213 = vmatpush.bf16.msra.mxu0 0
  %214 = vmatpush.bf16.msra.mxu0 0
  %215 = vmatpush.bf16.msra.mxu0 0
  %216 = vmatpush.bf16.msra.mxu0 %v170
  %217 = vmatpush.bf16.msra.mxu0 %v169
  %218 = vmatpush.bf16.msra.mxu0 %v168
  %219 = vmatpush.bf16.msra.mxu0 %v167
  %220 = vmatmul.bf16.gmra.mxu0 %v207
  %v221 = vpop.f32.mrf.mxu0
  %v222 = vadd.f32 %v178, %v221
  %v223 = vpop.f32.mrf.mxu0
  %v224 = vadd.f32 %v183, %v223
  %225 = vmatmul.bf16.gmra.mxu0 %v210
  %v226 = vpop.f32.mrf.mxu0
  %v227 = vadd.f32 %v188, %v226
  %v228 = vpop.f32.mrf.mxu0
  %v229 = vadd.f32 %v193, %v228
  %230 = vdwg.mxu0
  %231 = vst [vmem:[%s5] sm:$0xff] %v222
  %232 = vst [vmem:[%s5 + $0x8] sm:$0xff] %v224
  %233 = vst [vmem:[%s5 + $0x10] sm:$0xff] %v227
  %234 = vst [vmem:[%s5 + $0x18] sm:$0xff] %v229
  // Predicated region
  $region22: #{_ffn_apply_transposed.1} parent=0 // pred_check
    _
  $region23: #{_ffn_apply_transposed.1} parent=0 // pred_check_branch
    %236 = sbr.rel (0) target = $region25
  $region24: #{_ffn_apply_transposed.1} parent=0 // pred_region
    _
  $region25: #{_ffn_apply_transposed.1} parent=0 // pred_fallthru
    _
  // Predicated region
  $region26: #{_ffn_apply_transposed.1} parent=0 // pred_check
    _
  $region27: #{_ffn_apply_transposed.1} parent=0 // pred_check_branch
    %238 = sbr.rel (0) target = $region29
  $region28: #{_ffn_apply_transposed.1} parent=0 // pred_region
    _
  $region29: #{_ffn_apply_transposed.1} parent=0 // pred_fallthru
    _

</llo_original>
